<compile_context>
chip_gen: v7x
topology: tpu7x:2x2x1
jax: 0.10.0
libtpu: 0.0.40
codegen_flags: <defaults>
</compile_context>

<pallas_src>
import functools

import numpy as np
import jax
import jax.numpy as jnp
from jax import lax
from jax.experimental import pallas as pl
from jax.experimental.pallas import tpu as pltpu

_LANE = 128


def _round_up(x, m):
    return ((x + m - 1) // m) * m


def _router_kernel(x_ref, w_ref, b_ref, o_ref):
    # x_ref: (TB, K) caller dtype; w_ref: (K, O_pad) bf16; b_ref: (1, O_pad) f32
    # Per-tile bf16 cast (VPU slot has slack); f32 MXU accumulation; f32 bias.
    x = x_ref[...].astype(jnp.bfloat16)
    o_ref[...] = (
        jnp.dot(x, w_ref[...], preferred_element_type=jnp.float32) + b_ref[...]
    )
    # TODO(synk): training-mode `x + torch.rand(B, out_dim)` noise is not
    # implemented (eval-mode semantics only; torch RNG is not reproducible here).


def prepare_router_params(w_oihw, bias, *, input_hw, patch_size=4, stride=4):
    """One-time weight/bias prep (hoisted out of the per-forward path).

    Tiles the (O, C, ph, pw) conv kernel over the spatial extent so conv +
    spatial-sum becomes a single dense contraction against the flat activation,
    pads O up to a lane multiple (128) for unmasked stores, folds the
    patch-count P into the bias, and casts the weight to bf16 for the MXU.
    """
    H, W = input_hw
    assert patch_size == stride, "Router uses kernel_size == stride patches"
    O, C, ph, pw = w_oihw.shape
    assert ph == patch_size and pw == patch_size
    assert H % stride == 0 and W % stride == 0
    Hp, Wp = H // stride, W // stride
    P = Hp * Wp                               # patches summed by the module
    K = C * H * W                             # full contraction dim
    O_pad = _round_up(O, _LANE)

    w_full = jnp.tile(w_oihw.astype(jnp.float32), (1, 1, Hp, Wp))   # (O,C,H,W)
    w_big = w_full.reshape(O, K).T                                   # (K, O)
    w_big = jnp.pad(w_big, ((0, 0), (0, O_pad - O))).astype(jnp.bfloat16)
    b_big = jnp.pad((float(P) * bias.astype(jnp.float32)).reshape(1, O),
                    ((0, 0), (0, O_pad - O)))                        # (1,O_pad) f32
    return w_big, b_big


def _choose_tb(B, tile_rows):
    # Guarantee >=2 grid steps when possible (so the "parallel" axis shards
    # across both TensorCores on v7x), keep tiles a multiple of 256 so the MXU
    # M dimension fills, and cap by tile_rows (VMEM budget: default 1024 fits
    # every generation's scoped VMEM; v6e may raise to 2048, keep <=2048 on v7x).
    if B <= 256:
        tb = B
    else:
        half = (B + 1) // 2
        tb = _round_up(half, 256)
    return min(tb, tile_rows)


def router_forward(x_nchw, w_big, b_big, *, out_dim=None, tile_rows=1024,
                   return_padded=False):
    """Pallas Router.forward (rtype='conv2d', eval mode).

    `w_big`/`b_big` come from prepare_router_params (precompute once).  The
    activation is streamed in the caller's dtype (pass bf16 to halve the HBM
    stream); the MXU runs bf16 x bf16 -> f32 with an f32 bias add.  With
    return_padded=True the lane-dense (B, 128) buffer is returned so downstream
    gating can consume it without an extra trim pass.
    """
    assert tile_rows % 8 == 0 and tile_rows >= 8
    B, C, H, W = x_nchw.shape
    K = C * H * W
    Kw, O_pad = w_big.shape
    assert Kw == K and O_pad % _LANE == 0
    assert b_big.shape == (1, O_pad)

    # Contiguous (free) reshape; NO wrapper-side astype (that would be an extra
    # full-array HBM read+write) -- the per-tile cast happens inside the kernel.
    x2d = x_nchw.reshape(B, K)

    tb = _choose_tb(B, tile_rows)
    num_steps = pl.cdiv(B, tb)
    grid = (num_steps,)

    # Deeper activation buffering only when the grid is deep enough to use it
    # (helps v5e where the per-tile DMA roughly co-binds with the MXU pass).
    if num_steps >= 3:
        x_spec = pl.BlockSpec((tb, K), lambda i: (i, 0),
                              pipeline_mode=pl.Buffered(3))
    else:
        x_spec = pl.BlockSpec((tb, K), lambda i: (i, 0))

    cost = pl.CostEstimate(
        flops=2 * B * K * O_pad,
        transcendentals=0,
        bytes_accessed=(B * K * x2d.dtype.itemsize
                        + K * O_pad * 2          # bf16 weight (resident)
                        + B * O_pad * 4),        # f32 output
    )

    out_pad = pl.pallas_call(
        _router_kernel,
        out_shape=jax.ShapeDtypeStruct((B, O_pad), jnp.float32),
        grid=grid,
        in_specs=[
            x_spec,                                        # activation tiles
            pl.BlockSpec((K, O_pad), lambda i: (0, 0)),    # weight: resident
            pl.BlockSpec((1, O_pad), lambda i: (0, 0)),    # bias:   resident
        ],
        out_specs=pl.BlockSpec((tb, O_pad), lambda i: (i, 0)),
        compiler_params=pltpu.CompilerParams(
            dimension_semantics=("parallel",),
        ),
        cost_estimate=cost,
    )(x2d, w_big, b_big)

    if return_padded:
        return out_pad
    assert out_dim is not None, "out_dim required when return_padded=False"
    return out_pad[:, :out_dim]


def _reference_forward(x_nchw, w_oihw, bias, *, stride=4):
    """Pure-JAX reference: Conv2d(NCHW, OIHW, stride) then sum over H', W'.

    Inputs are rounded to bf16 (then computed in f32) to mirror the kernel's
    bf16 MXU inputs with f32 accumulation.
    """
    xb = x_nchw.astype(jnp.bfloat16).astype(jnp.float32)
    wb = w_oihw.astype(jnp.bfloat16).astype(jnp.float32)
    y = lax.conv_general_dilated(
        xb, wb, window_strides=(stride, stride), padding="VALID",
        dimension_numbers=("NCHW", "OIHW", "NCHW"))
    y = y + bias.astype(jnp.float32).reshape(1, -1, 1, 1)
    return jnp.sum(jnp.sum(y, axis=2), axis=2)


if __name__ == "__main__":
    # Shapes consistent with the module: nn.Conv2d(3, out_dim, 4, 4) fixes 3
    # input channels; CIFAR-like NCHW spatial input.
    B, C, H, W = 2, 3, 16, 16
    out_dim, patch_size, stride = 8, 4, 4

    key = jax.random.PRNGKey(0)
    kx, kw, kb, kx2 = jax.random.split(key, 4)
    x = jax.random.normal(kx, (B, C, H, W), dtype=jnp.float32)

    # Conv2d parameter shapes: weight (out_dim, 3, 4, 4), bias (out_dim,).
    # reset_parameters() zeroes them; validate with nonzero weights first
    # (real numerics), then reproduce the module-exact zeroed parameters.
    w_nonzero = jax.random.normal(kw, (out_dim, C, patch_size, patch_size),
                                  dtype=jnp.float32) * 0.1
    b_nonzero = jax.random.normal(kb, (out_dim,), dtype=jnp.float32) * 0.1

    # One-time (hoisted) weight/bias preparation.
    w_big, b_big = prepare_router_params(
        w_nonzero, b_nonzero, input_hw=(H, W),
        patch_size=patch_size, stride=stride)

    # Forward, jitted with the (tiny) padded-output trim avoided entirely.
    fwd_padded = jax.jit(functools.partial(
        router_forward, out_dim=out_dim, return_padded=True))

    # 1) Kernel correctness vs plain-JAX conv reference (single-block grid).
    out_pad = jax.block_until_ready(fwd_padded(x, w_big, b_big))
    assert out_pad.shape == (B, 128)
    out_ref = jax.block_until_ready(
        _reference_forward(x, w_nonzero, b_nonzero, stride=stride))
    np.testing.assert_allclose(np.asarray(out_pad)[:, :out_dim],
                               np.asarray(out_ref), rtol=5e-3, atol=5e-3)

    # 2) Multi-step "parallel" grid (>=2 steps so both v7x TensorCores work).
    B2 = 512
    x_big = jax.random.normal(kx2, (B2, C, H, W), dtype=jnp.float32)
    out_big = jax.block_until_ready(fwd_padded(x_big, w_big, b_big))
    ref_big = jax.block_until_ready(
        _reference_forward(x_big, w_nonzero, b_nonzero, stride=stride))
    np.testing.assert_allclose(np.asarray(out_big)[:, :out_dim],
                               np.asarray(ref_big), rtol=5e-3, atol=5e-3)

    # 3) bf16 activations (halved HBM stream), small tiles -> deep grid that
    #    exercises the Buffered(3) activation pipeline and the trimmed output.
    fwd_trim_small = jax.jit(functools.partial(
        router_forward, out_dim=out_dim, tile_rows=128, return_padded=False))
    out_bf16 = jax.block_until_ready(
        fwd_trim_small(x_big.astype(jnp.bfloat16), w_big, b_big))
    assert out_bf16.shape == (B2, out_dim)
    np.testing.assert_allclose(np.asarray(out_bf16), np.asarray(ref_big),
                               rtol=5e-3, atol=5e-3)

    # 4) Module-exact parameters (reset_parameters zeros weight and bias).
    w0_big, b0_big = prepare_router_params(
        w_nonzero * 0.0, b_nonzero * 0.0, input_hw=(H, W),
        patch_size=patch_size, stride=stride)
    out_zero = jax.block_until_ready(fwd_padded(x, w0_big, b0_big))
    np.testing.assert_allclose(np.asarray(out_zero)[:, :out_dim],
                               np.zeros((B, out_dim), np.float32))

    print("KERNEL_OK")
</pallas_src>

<mosaic_0001>
module attributes {stable_mosaic.version = 11 : i64} {
  func.func @_router_kernel(%arg0: i32, %arg1: memref<2x768xf32, #tpu.memory_space<vmem>>, %arg2: memref<768x128xbf16, #tpu.memory_space<vmem>>, %arg3: memref<1x128xf32, #tpu.memory_space<vmem>>, %arg4: memref<2x128xf32, #tpu.memory_space<vmem>>) attributes {dimension_semantics = [#tpu.dimension_semantics<parallel>], iteration_bounds = array<i64: 1>, scalar_prefetch = 0 : i64, scratch_operands = 0 : i64, tpu.core_type = #tpu.core_type<tc>, window_params = [{transform_indices = @transform_0, window_bounds = array<i64: 2, 768>}, {pipeline_mode = #tpu.pipeline_mode<synchronous>, transform_indices = @transform_1, window_bounds = array<i64: 768, 128>}, {pipeline_mode = #tpu.pipeline_mode<synchronous>, transform_indices = @transform_2, window_bounds = array<i64: 1, 128>}, {transform_indices = @transform_3, window_bounds = array<i64: 2, 128>}]} {
    %c0 = arith.constant 0 : index
    %c0_0 = arith.constant 0 : index
    %0 = vector.load %arg1[%c0, %c0_0] : memref<2x768xf32, #tpu.memory_space<vmem>>, vector<2x768xf32>
    %1 = arith.truncf %0 : vector<2x768xf32> to vector<2x768xbf16>
    %c0_1 = arith.constant 0 : index
    %c0_2 = arith.constant 0 : index
    %2 = vector.load %arg2[%c0_1, %c0_2] : memref<768x128xbf16, #tpu.memory_space<vmem>>, vector<768x128xbf16>
    %cst = arith.constant dense<0.000000e+00> : vector<2x128xf32>
    %3 = tpu.matmul %1, %2, %cst {dimension_numbers = #tpu.dot_dimension_numbers<[1], [0], [0], [1], [0, 0, 1, 1], [], []>} : vector<2x768xbf16>, vector<768x128xbf16>, vector<2x128xf32> -> vector<2x128xf32>
    %c0_3 = arith.constant 0 : index
    %c0_4 = arith.constant 0 : index
    %4 = vector.load %arg3[%c0_3, %c0_4] : memref<1x128xf32, #tpu.memory_space<vmem>>, vector<1x128xf32>
    %5 = vector.broadcast %4 : vector<1x128xf32> to vector<2x128xf32>
    %6 = arith.addf %3, %5 : vector<2x128xf32>
    %c0_5 = arith.constant 0 : index
    %c0_6 = arith.constant 0 : index
    %7 = vector.load %arg4[%c0_5, %c0_6] : memref<2x128xf32, #tpu.memory_space<vmem>>, vector<2x128xf32>
    tpu.vector_store %arg4[%c0_5, %c0_6], %6 {strides = array<i32>} : memref<2x128xf32, #tpu.memory_space<vmem>>, vector<2x128xf32>,
    return
  }
  func.func @transform_0(%arg0: i32) -> (i32, i32) {
    %c0_i32 = arith.constant 0 : i32
    %c0_i32_0 = arith.constant 0 : i32
    return %arg0, %c0_i32 : i32, i32
  }
  func.func @transform_1(%arg0: i32) -> (i32, i32) {
    %c0_i32 = arith.constant 0 : i32
    %c0_i32_0 = arith.constant 0 : i32
    %c0_i32_1 = arith.constant 0 : i32
    return %c0_i32, %c0_i32_0 : i32, i32
  }
  func.func @transform_2(%arg0: i32) -> (i32, i32) {
    %c0_i32 = arith.constant 0 : i32
    %c0_i32_0 = arith.constant 0 : i32
    %c0_i32_1 = arith.constant 0 : i32
    return %c0_i32, %c0_i32_0 : i32, i32
  }
  func.func @transform_3(%arg0: i32) -> (i32, i32) {
    %c0_i32 = arith.constant 0 : i32
    %c0_i32_0 = arith.constant 0 : i32
    return %arg0, %c0_i32 : i32, i32
  }
}

</mosaic_0001>

<llo_original>
// kernel: router_forward.1
$region0: #{router_forward.1}
  #allocation0 [shape = 'u32[]', space=smem, size = 0x4, offset = 0x4, fixed_abs, tag = 'smem constant byte address 0x4 - core index']
  #allocation1 [shape = 'u32[144,128]{1,0:T(1,128)}', space=vmem, size = 0x12000, scoped, tag = 'internal scratch']
  %s0 = inlined_call_operand.vmem [shape: f32[2,768], index: 0, kind: input, shape index: {}]
  %s1 = inlined_call_operand.hbm [shape: bf16[768,128], index: 1, kind: input, shape index: {}]
  %s2 = inlined_call_operand.vmem [shape: f32[1,128], index: 2, kind: input, shape index: {}]
  %s3 = inlined_call_operand.hbm [shape: f32[2,128], index: 3, kind: output, shape index: {}]
  %s4 = sld [smem:[#allocation0]]
  $region26: #{router_forward.1} parent=0
    _
  %s6 = ssub.s32 1, %s4
  %s7 = scalar_select 0, %s6, %s4
  $region1: #{router_forward.1} parent=0
    #allocation2 [shape = 'u8[196608]{0}', space=vmem, size = 0x30000, scoped, tag = 'input window, operand 1, single buffered']
    #allocation3 [shape = 's32[1]{0}', space=sflag, size = 0x4, scoped, tag = 'scoped memory for router_forward.1']
    #allocation4 [shape = 's32[1]{0}', space=sflag, size = 0x4, scoped, tag = 'scoped memory for router_forward.1']
    #allocation5 [shape = 'u8[1024]{0}', space=vmem, size = 0x400, scoped, tag = 'output window, operand 0, single buffered']
    %8 = vsyncpa [#allocation3], 0
    %9 = vsyncpa [#allocation4], 0
    // Predicated region
    $region2: #{router_forward.1} parent=1 // pred_check
      _
    $region3: #{router_forward.1} parent=1 // pred_check_branch
      %11 = sbr.rel (0) target = $region5
    $region4: #{router_forward.1} parent=1 // pred_region
      _
    $region5: #{router_forward.1} parent=1 // pred_fallthru
      _
    // Predicated region
    $region6: #{router_forward.1} parent=1 // pred_check
      _
    $region7: #{router_forward.1} parent=1 // pred_check_branch
      %13 = sbr.rel (0) target = $region9
    $region8: #{router_forward.1} parent=1 // pred_region
      %s15 = ssub.s32 6144, 6144
      %16 = vsyncadd [#allocation3], %s15
      %s17 = sshll.u32 [#allocation2], 4
      %s18 = int_to_ptr.vmem [resolvable:$true] %s17
      %23 = dma.hbm_to_vmem [thread:$0]  %s1, 6144, %s18, [#allocation3], 64, 64, 4
    $region9: #{router_forward.1} parent=1 // pred_fallthru
      _
    // Predicated region
    $region10: #{router_forward.1} parent=1 // pred_check
      _
    $region11: #{router_forward.1} parent=1 // pred_check_branch
      %25 = sbr.rel (0) target = $region13
    $region12: #{router_forward.1} parent=1 // pred_region
      _
    $region13: #{router_forward.1} parent=1 // pred_fallthru
      _
    // Predicated region
    $region14: #{router_forward.1} parent=1 // pred_check
      _
    $region15: #{router_forward.1} parent=1 // pred_check_branch
      %27 = sbr.rel (0) target = $region17
    $region16: #{router_forward.1} parent=1 // pred_region
      %28 = dma.done [#allocation3], 6144
    $region17: #{router_forward.1} parent=1 // pred_fallthru
      _
    %v30 = vld [vmem:[%s0] sm:$0xff]
    %v31 = vld [vmem:[%s0 + $0x8] sm:$0xf]
    %v34 = vcombine.high %v30, %v30
    %v36 = vunpack.c.l.s4 1983009808
    %v37 = vunpack.c.0.s8 %v36
    %v38 = vlaneseq
    %v39 = vshrl.u32 %v38, 7
    %v40 = vsub.s32 %v37, %v39
    %v41 = vrot.slane %v30, %v40
    %v43 = vunpack.c.l.s4 1983009808
    %v44 = vunpack.c.0.s8 %v43
    %v45 = vlaneseq
    %v46 = vshrl.u32 %v45, 7
    %v47 = vsub.s32 %v44, %v46
    %v48 = vrot.slane %v34, %v47
    %v49 = vcombine.high %v41, %v41
    %v50 = vcombine.high %v48, %v48
    %v52 = vunpack.c.l.s4 1983009808
    %v53 = vunpack.c.0.s8 %v52
    %v54 = vlaneseq
    %v55 = vshrl.u32 %v54, 7
    %v56 = vsub.s32 %v53, %v55
    %v57 = vrot.slane %v31, %v56
    %v58 = vcombine.high %v57, %v57
    %v65 = vpack.c.bf16 %v41, %v41
    %v66 = vpack.c.bf16 %v49, %v49
    %v67 = vpack.c.bf16 %v48, %v48
    %v68 = vpack.c.bf16 %v50, %v50
    %v69 = vpack.c.bf16 %v57, %v57
    %v70 = vpack.c.bf16 %v58, %v58
    %v71 = vld [vmem:[#allocation2] sm:$0xf]
    %v72 = vld [vmem:[#allocation2 + $0x4] sm:$0xf]
    %v73 = vld [vmem:[#allocation2 + $0x8] sm:$0xf]
    %v74 = vld [vmem:[#allocation2 + $0xc] sm:$0xf]
    %v75 = vld [vmem:[#allocation2 + $0x10] sm:$0xf]
    %v76 = vld [vmem:[#allocation2 + $0x14] sm:$0xf]
    %v77 = vld [vmem:[#allocation2 + $0x18] sm:$0xf]
    %v78 = vld [vmem:[#allocation2 + $0x1c] sm:$0xf]
    %v79 = vld [vmem:[#allocation2 + $0x20] sm:$0xf]
    %v80 = vld [vmem:[#allocation2 + $0x24] sm:$0xf]
    %v81 = vld [vmem:[#allocation2 + $0x28] sm:$0xf]
    %v82 = vld [vmem:[#allocation2 + $0x2c] sm:$0xf]
    %v83 = vld [vmem:[#allocation2 + $0x30] sm:$0xf]
    %v84 = vld [vmem:[#allocation2 + $0x34] sm:$0xf]
    %v85 = vld [vmem:[#allocation2 + $0x38] sm:$0xf]
    %v86 = vld [vmem:[#allocation2 + $0x3c] sm:$0xf]
    %v87 = vld [vmem:[#allocation2 + $0x40] sm:$0xf]
    %v88 = vld [vmem:[#allocation2 + $0x44] sm:$0xf]
    %v89 = vld [vmem:[#allocation2 + $0x48] sm:$0xf]
    %v90 = vld [vmem:[#allocation2 + $0x4c] sm:$0xf]
    %v91 = vld [vmem:[#allocation2 + $0x50] sm:$0xf]
    %v92 = vld [vmem:[#allocation2 + $0x54] sm:$0xf]
    %v93 = vld [vmem:[#allocation2 + $0x58] sm:$0xf]
    %v94 = vld [vmem:[#allocation2 + $0x5c] sm:$0xf]
    %v95 = vld [vmem:[#allocation2 + $0x60] sm:$0xf]
    %v96 = vld [vmem:[#allocation2 + $0x64] sm:$0xf]
    %v97 = vld [vmem:[#allocation2 + $0x68] sm:$0xf]
    %v98 = vld [vmem:[#allocation2 + $0x6c] sm:$0xf]
    %v99 = vld [vmem:[#allocation2 + $0x70] sm:$0xf]
    %v100 = vld [vmem:[#allocation2 + $0x74] sm:$0xf]
    %v101 = vld [vmem:[#allocation2 + $0x78] sm:$0xf]
    %v102 = vld [vmem:[#allocation2 + $0x7c] sm:$0xf]
    %v103 = vld [vmem:[#allocation2 + $0x80] sm:$0xf]
    %v104 = vld [vmem:[#allocation2 + $0x84] sm:$0xf]
    %v105 = vld [vmem:[#allocation2 + $0x88] sm:$0xf]
    %v106 = vld [vmem:[#allocation2 + $0x8c] sm:$0xf]
    %v107 = vld [vmem:[#allocation2 + $0x90] sm:$0xf]
    %v108 = vld [vmem:[#allocation2 + $0x94] sm:$0xf]
    %v109 = vld [vmem:[#allocation2 + $0x98] sm:$0xf]
    %v110 = vld [vmem:[#allocation2 + $0x9c] sm:$0xf]
    %v111 = vld [vmem:[#allocation2 + $0xa0] sm:$0xf]
    %v112 = vld [vmem:[#allocation2 + $0xa4] sm:$0xf]
    %v113 = vld [vmem:[#allocation2 + $0xa8] sm:$0xf]
    %v114 = vld [vmem:[#allocation2 + $0xac] sm:$0xf]
    %v115 = vld [vmem:[#allocation2 + $0xb0] sm:$0xf]
    %v116 = vld [vmem:[#allocation2 + $0xb4] sm:$0xf]
    %v117 = vld [vmem:[#allocation2 + $0xb8] sm:$0xf]
    %v118 = vld [vmem:[#allocation2 + $0xbc] sm:$0xf]
    %v119 = vld [vmem:[#allocation2 + $0xc0] sm:$0xf]
    %v120 = vld [vmem:[#allocation2 + $0xc4] sm:$0xf]
    %v121 = vld [vmem:[#allocation2 + $0xc8] sm:$0xf]
    %v122 = vld [vmem:[#allocation2 + $0xcc] sm:$0xf]
    %v123 = vld [vmem:[#allocation2 + $0xd0] sm:$0xf]
    %v124 = vld [vmem:[#allocation2 + $0xd4] sm:$0xf]
    %v125 = vld [vmem:[#allocation2 + $0xd8] sm:$0xf]
    %v126 = vld [vmem:[#allocation2 + $0xdc] sm:$0xf]
    %v127 = vld [vmem:[#allocation2 + $0xe0] sm:$0xf]
    %v128 = vld [vmem:[#allocation2 + $0xe4] sm:$0xf]
    %v129 = vld [vmem:[#allocation2 + $0xe8] sm:$0xf]
    %v130 = vld [vmem:[#allocation2 + $0xec] sm:$0xf]
    %v131 = vld [vmem:[#allocation2 + $0xf0] sm:$0xf]
    %v132 = vld [vmem:[#allocation2 + $0xf4] sm:$0xf]
    %v133 = vld [vmem:[#allocation2 + $0xf8] sm:$0xf]
    %v134 = vld [vmem:[#allocation2 + $0xfc] sm:$0xf]
    %v135 = vld [vmem:[#allocation2 + $0x100] sm:$0xf]
    %v136 = vld [vmem:[#allocation2 + $0x104] sm:$0xf]
    %v137 = vld [vmem:[#allocation2 + $0x108] sm:$0xf]
    %v138 = vld [vmem:[#allocation2 + $0x10c] sm:$0xf]
    %v139 = vld [vmem:[#allocation2 + $0x110] sm:$0xf]
    %v140 = vld [vmem:[#allocation2 + $0x114] sm:$0xf]
    %v141 = vld [vmem:[#allocation2 + $0x118] sm:$0xf]
    %v142 = vld [vmem:[#allocation2 + $0x11c] sm:$0xf]
    %v143 = vld [vmem:[#allocation2 + $0x120] sm:$0xf]
    %v144 = vld [vmem:[#allocation2 + $0x124] sm:$0xf]
    %v145 = vld [vmem:[#allocation2 + $0x128] sm:$0xf]
    %v146 = vld [vmem:[#allocation2 + $0x12c] sm:$0xf]
    %v147 = vld [vmem:[#allocation2 + $0x130] sm:$0xf]
    %v148 = vld [vmem:[#allocation2 + $0x134] sm:$0xf]
    %v149 = vld [vmem:[#allocation2 + $0x138] sm:$0xf]
    %v150 = vld [vmem:[#allocation2 + $0x13c] sm:$0xf]
    %v151 = vld [vmem:[#allocation2 + $0x140] sm:$0xf]
    %v152 = vld [vmem:[#allocation2 + $0x144] sm:$0xf]
    %v153 = vld [vmem:[#allocation2 + $0x148] sm:$0xf]
    %v154 = vld [vmem:[#allocation2 + $0x14c] sm:$0xf]
    %v155 = vld [vmem:[#allocation2 + $0x150] sm:$0xf]
    %v156 = vld [vmem:[#allocation2 + $0x154] sm:$0xf]
    %v157 = vld [vmem:[#allocation2 + $0x158] sm:$0xf]
    %v158 = vld [vmem:[#allocation2 + $0x15c] sm:$0xf]
    %v159 = vld [vmem:[#allocation2 + $0x160] sm:$0xf]
    %v160 = vld [vmem:[#allocation2 + $0x164] sm:$0xf]
    %v161 = vld [vmem:[#allocation2 + $0x168] sm:$0xf]
    %v162 = vld [vmem:[#allocation2 + $0x16c] sm:$0xf]
    %v163 = vld [vmem:[#allocation2 + $0x170] sm:$0xf]
    %v164 = vld [vmem:[#allocation2 + $0x174] sm:$0xf]
    %v165 = vld [vmem:[#allocation2 + $0x178] sm:$0xf]
    %v166 = vld [vmem:[#allocation2 + $0x17c] sm:$0xf]
    %v167 = vld [vmem:[%s2] sm:$0x1]
    %v169 = vlaneseq
    %v170 = vshrl.u32 %v169, 7
    %v171 = vsub.s32 0, %v170
    %v172 = vrot.slane %v167, %v171
    %v270 = vunpack.c.l.b16 %v71
    %v271 = vunpack.c.l.b16 %v72
    %v272 = vunpack.c.l.b16 %v73
    %v273 = vunpack.c.l.b16 %v74
    %v274 = vunpack.c.l.b16 %v75
    %v275 = vunpack.c.l.b16 %v76
    %v276 = vunpack.c.l.b16 %v77
    %v277 = vunpack.c.l.b16 %v78
    %v278 = vunpack.c.l.b16 %v79
    %v279 = vunpack.c.l.b16 %v80
    %v280 = vunpack.c.l.b16 %v81
    %v281 = vunpack.c.l.b16 %v82
    %v282 = vunpack.c.l.b16 %v83
    %v283 = vunpack.c.l.b16 %v84
    %v284 = vunpack.c.l.b16 %v85
    %v285 = vunpack.c.l.b16 %v86
    %v286 = vunpack.c.l.b16 %v87
    %v287 = vunpack.c.l.b16 %v88
    %v288 = vunpack.c.l.b16 %v89
    %v289 = vunpack.c.l.b16 %v90
    %v290 = vunpack.c.l.b16 %v91
    %v291 = vunpack.c.l.b16 %v92
    %v292 = vunpack.c.l.b16 %v93
    %v293 = vunpack.c.l.b16 %v94
    %v294 = vunpack.c.l.b16 %v95
    %v295 = vunpack.c.l.b16 %v96
    %v296 = vunpack.c.l.b16 %v97
    %v297 = vunpack.c.l.b16 %v98
    %v298 = vunpack.c.l.b16 %v99
    %v299 = vunpack.c.l.b16 %v100
    %v300 = vunpack.c.l.b16 %v101
    %v301 = vunpack.c.l.b16 %v102
    %v302 = vunpack.c.l.b16 %v103
    %v303 = vunpack.c.l.b16 %v104
    %v304 = vunpack.c.l.b16 %v105
    %v305 = vunpack.c.l.b16 %v106
    %v306 = vunpack.c.l.b16 %v107
    %v307 = vunpack.c.l.b16 %v108
    %v308 = vunpack.c.l.b16 %v109
    %v309 = vunpack.c.l.b16 %v110
    %v310 = vunpack.c.l.b16 %v111
    %v311 = vunpack.c.l.b16 %v112
    %v312 = vunpack.c.l.b16 %v113
    %v313 = vunpack.c.l.b16 %v114
    %v314 = vunpack.c.l.b16 %v115
    %v315 = vunpack.c.l.b16 %v116
    %v316 = vunpack.c.l.b16 %v117
    %v317 = vunpack.c.l.b16 %v118
    %v318 = vunpack.c.l.b16 %v119
    %v319 = vunpack.c.l.b16 %v120
    %v320 = vunpack.c.l.b16 %v121
    %v321 = vunpack.c.l.b16 %v122
    %v322 = vunpack.c.l.b16 %v123
    %v323 = vunpack.c.l.b16 %v124
    %v324 = vunpack.c.l.b16 %v125
    %v325 = vunpack.c.l.b16 %v126
    %v326 = vunpack.c.l.b16 %v127
    %v327 = vunpack.c.l.b16 %v128
    %v328 = vunpack.c.l.b16 %v129
    %v329 = vunpack.c.l.b16 %v130
    %v330 = vunpack.c.l.b16 %v131
    %v331 = vunpack.c.l.b16 %v132
    %v332 = vunpack.c.l.b16 %v133
    %v333 = vunpack.c.l.b16 %v134
    %v334 = vunpack.c.l.b16 %v135
    %v335 = vunpack.c.l.b16 %v136
    %v336 = vunpack.c.l.b16 %v137
    %v337 = vunpack.c.l.b16 %v138
    %v338 = vunpack.c.l.b16 %v139
    %v339 = vunpack.c.l.b16 %v140
    %v340 = vunpack.c.l.b16 %v141
    %v341 = vunpack.c.l.b16 %v142
    %v342 = vunpack.c.l.b16 %v143
    %v343 = vunpack.c.l.b16 %v144
    %v344 = vunpack.c.l.b16 %v145
    %v345 = vunpack.c.l.b16 %v146
    %v346 = vunpack.c.l.b16 %v147
    %v347 = vunpack.c.l.b16 %v148
    %v348 = vunpack.c.l.b16 %v149
    %v349 = vunpack.c.l.b16 %v150
    %v350 = vunpack.c.l.b16 %v151
    %v351 = vunpack.c.l.b16 %v152
    %v352 = vunpack.c.l.b16 %v153
    %v353 = vunpack.c.l.b16 %v154
    %v354 = vunpack.c.l.b16 %v155
    %v355 = vunpack.c.l.b16 %v156
    %v356 = vunpack.c.l.b16 %v157
    %v357 = vunpack.c.l.b16 %v158
    %v358 = vunpack.c.l.b16 %v159
    %v359 = vunpack.c.l.b16 %v160
    %v360 = vunpack.c.l.b16 %v161
    %v361 = vunpack.c.l.b16 %v162
    %v362 = vunpack.c.l.b16 %v163
    %v363 = vunpack.c.l.b16 %v164
    %v364 = vunpack.c.l.b16 %v165
    %v365 = vunpack.c.l.b16 %v166
    %v366 = vpack.c.b16 %v271, %v270
    %v367 = vpack.c.b16 %v273, %v272
    %v368 = vpack.c.b16 %v275, %v274
    %v369 = vpack.c.b16 %v277, %v276
    %v370 = vpack.c.b16 %v279, %v278
    %v371 = vpack.c.b16 %v281, %v280
    %v372 = vpack.c.b16 %v283, %v282
    %v373 = vpack.c.b16 %v285, %v284
    %v374 = vpack.c.b16 %v287, %v286
    %v375 = vpack.c.b16 %v289, %v288
    %v376 = vpack.c.b16 %v291, %v290
    %v377 = vpack.c.b16 %v293, %v292
    %v378 = vpack.c.b16 %v295, %v294
    %v379 = vpack.c.b16 %v297, %v296
    %v380 = vpack.c.b16 %v299, %v298
    %v381 = vpack.c.b16 %v301, %v300
    %v382 = vpack.c.b16 %v303, %v302
    %v383 = vpack.c.b16 %v305, %v304
    %v384 = vpack.c.b16 %v307, %v306
    %v385 = vpack.c.b16 %v309, %v308
    %v386 = vpack.c.b16 %v311, %v310
    %v387 = vpack.c.b16 %v313, %v312
    %v388 = vpack.c.b16 %v315, %v314
    %v389 = vpack.c.b16 %v317, %v316
    %v390 = vpack.c.b16 %v319, %v318
    %v391 = vpack.c.b16 %v321, %v320
    %v392 = vpack.c.b16 %v323, %v322
    %v393 = vpack.c.b16 %v325, %v324
    %v394 = vpack.c.b16 %v327, %v326
    %v395 = vpack.c.b16 %v329, %v328
    %v396 = vpack.c.b16 %v331, %v330
    %v397 = vpack.c.b16 %v333, %v332
    %v398 = vpack.c.b16 %v335, %v334
    %v399 = vpack.c.b16 %v337, %v336
    %v400 = vpack.c.b16 %v339, %v338
    %v401 = vpack.c.b16 %v341, %v340
    %v402 = vpack.c.b16 %v343, %v342
    %v403 = vpack.c.b16 %v345, %v344
    %v404 = vpack.c.b16 %v347, %v346
    %v405 = vpack.c.b16 %v349, %v348
    %v406 = vpack.c.b16 %v351, %v350
    %v407 = vpack.c.b16 %v353, %v352
    %v408 = vpack.c.b16 %v355, %v354
    %v409 = vpack.c.b16 %v357, %v356
    %v410 = vpack.c.b16 %v359, %v358
    %v411 = vpack.c.b16 %v361, %v360
    %v412 = vpack.c.b16 %v363, %v362
    %v413 = vpack.c.b16 %v365, %v364
    %462 = vmatprep.subr.bf16.mxu0 0
    %463 = vmatpush1.bf16.msra.mxu0 %v366
    %464 = vmatprep.subr.bf16.mxu0 0
    %465 = vmatpush1.bf16.msra.mxu0 %v367
    %466 = vmatprep.subr.bf16.mxu0 0
    %467 = vmatpush1.bf16.msra.mxu0 %v368
    %468 = vmatprep.subr.bf16.mxu0 0
    %469 = vmatpush1.bf16.msra.mxu0 %v369
    %470 = vmatprep.subr.bf16.mxu0 0
    %471 = vmatpush1.bf16.msra.mxu0 %v370
    %472 = vmatprep.subr.bf16.mxu0 0
    %473 = vmatpush1.bf16.msra.mxu0 %v371
    %474 = vmatprep.subr.bf16.mxu0 0
    %475 = vmatpush1.bf16.msra.mxu0 %v372
    %476 = vmatprep.subr.bf16.mxu0 0
    %477 = vmatpush1.bf16.msra.mxu0 %v373
    %478 = vmatprep.subr.bf16.mxu0 0
    %479 = vmatpush1.bf16.msra.mxu0 %v374
    %480 = vmatprep.subr.bf16.mxu0 0
    %481 = vmatpush1.bf16.msra.mxu0 %v375
    %482 = vmatprep.subr.bf16.mxu0 0
    %483 = vmatpush1.bf16.msra.mxu0 %v376
    %484 = vmatprep.subr.bf16.mxu0 0
    %485 = vmatpush1.bf16.msra.mxu0 %v377
    %486 = vmatprep.subr.bf16.mxu0 0
    %487 = vmatpush1.bf16.msra.mxu0 %v378
    %488 = vmatprep.subr.bf16.mxu0 0
    %489 = vmatpush1.bf16.msra.mxu0 %v379
    %490 = vmatprep.subr.bf16.mxu0 0
    %491 = vmatpush1.bf16.msra.mxu0 %v380
    %492 = vmatprep.subr.bf16.mxu0 0
    %493 = vmatpush1.bf16.msra.mxu0 %v381
    %494 = vmatprep.mubr.bf16.mxu0 %v66
    %495 = vmatmul.mubr.bf16.gmra.mrb[0].mxu0 %v65
    %v496 = vpop.f32.mrb[0].mxu0
    %v497 = vadd.f32 %v172, %v496
    %v498 = vpop.f32.mrb[0].mxu0
    %v499 = vpop.f32.mrb[0].mxu0
    %v500 = vpop.f32.mrb[0].mxu0
    %501 = vdwg.mxu0
    %502 = vmatprep.subr.bf16.mxu0 0
    %503 = vmatpush1.bf16.msra.mxu0 %v382
    %504 = vmatprep.subr.bf16.mxu0 0
    %505 = vmatpush1.bf16.msra.mxu0 %v383
    %506 = vmatprep.subr.bf16.mxu0 0
    %507 = vmatpush1.bf16.msra.mxu0 %v384
    %508 = vmatprep.subr.bf16.mxu0 0
    %509 = vmatpush1.bf16.msra.mxu0 %v385
    %510 = vmatprep.subr.bf16.mxu0 0
    %511 = vmatpush1.bf16.msra.mxu0 %v386
    %512 = vmatprep.subr.bf16.mxu0 0
    %513 = vmatpush1.bf16.msra.mxu0 %v387
    %514 = vmatprep.subr.bf16.mxu0 0
    %515 = vmatpush1.bf16.msra.mxu0 %v388
    %516 = vmatprep.subr.bf16.mxu0 0
    %517 = vmatpush1.bf16.msra.mxu0 %v389
    %518 = vmatprep.subr.bf16.mxu0 0
    %519 = vmatpush1.bf16.msra.mxu0 %v390
    %520 = vmatprep.subr.bf16.mxu0 0
    %521 = vmatpush1.bf16.msra.mxu0 %v391
    %522 = vmatprep.subr.bf16.mxu0 0
    %523 = vmatpush1.bf16.msra.mxu0 %v392
    %524 = vmatprep.subr.bf16.mxu0 0
    %525 = vmatpush1.bf16.msra.mxu0 %v393
    %526 = vmatprep.subr.bf16.mxu0 0
    %527 = vmatpush1.bf16.msra.mxu0 %v394
    %528 = vmatprep.subr.bf16.mxu0 0
    %529 = vmatpush1.bf16.msra.mxu0 %v395
    %530 = vmatprep.subr.bf16.mxu0 0
    %531 = vmatpush1.bf16.msra.mxu0 %v396
    %532 = vmatprep.subr.bf16.mxu0 0
    %533 = vmatpush1.bf16.msra.mxu0 %v397
    %534 = vmatprep.mubr.bf16.mxu0 %v68
    %535 = vmatmul.mubr.bf16.gmra.mrb[0].mxu0 %v67
    %v536 = vpop.f32.mrb[0].mxu0
    %v537 = vadd.f32 %v497, %v536
    %v538 = vpop.f32.mrb[0].mxu0
    %v539 = vpop.f32.mrb[0].mxu0
    %v540 = vpop.f32.mrb[0].mxu0
    %541 = vdwg.mxu0
    %542 = vmatprep.subr.bf16.mxu0 0
    %543 = vmatpush1.bf16.msra.mxu0 %v398
    %544 = vmatprep.subr.bf16.mxu0 0
    %545 = vmatpush1.bf16.msra.mxu0 %v399
    %546 = vmatprep.subr.bf16.mxu0 0
    %547 = vmatpush1.bf16.msra.mxu0 %v400
    %548 = vmatprep.subr.bf16.mxu0 0
    %549 = vmatpush1.bf16.msra.mxu0 %v401
    %550 = vmatprep.subr.bf16.mxu0 0
    %551 = vmatpush1.bf16.msra.mxu0 %v402
    %552 = vmatprep.subr.bf16.mxu0 0
    %553 = vmatpush1.bf16.msra.mxu0 %v403
    %554 = vmatprep.subr.bf16.mxu0 0
    %555 = vmatpush1.bf16.msra.mxu0 %v404
    %556 = vmatprep.subr.bf16.mxu0 0
    %557 = vmatpush1.bf16.msra.mxu0 %v405
    %558 = vmatprep.subr.bf16.mxu0 0
    %559 = vmatpush1.bf16.msra.mxu0 %v406
    %560 = vmatprep.subr.bf16.mxu0 0
    %561 = vmatpush1.bf16.msra.mxu0 %v407
    %562 = vmatprep.subr.bf16.mxu0 0
    %563 = vmatpush1.bf16.msra.mxu0 %v408
    %564 = vmatprep.subr.bf16.mxu0 0
    %565 = vmatpush1.bf16.msra.mxu0 %v409
    %566 = vmatprep.subr.bf16.mxu0 0
    %567 = vmatpush1.bf16.msra.mxu0 %v410
    %568 = vmatprep.subr.bf16.mxu0 0
    %569 = vmatpush1.bf16.msra.mxu0 %v411
    %570 = vmatprep.subr.bf16.mxu0 0
    %571 = vmatpush1.bf16.msra.mxu0 %v412
    %572 = vmatprep.subr.bf16.mxu0 0
    %573 = vmatpush1.bf16.msra.mxu0 %v413
    %574 = vmatprep.mubr.bf16.mxu0 %v70
    %575 = vmatmul.mubr.bf16.gmra.mrb[0].mxu0 %v69
    %v576 = vpop.f32.mrb[0].mxu0
    %v577 = vadd.f32 %v537, %v576
    %v578 = vpop.f32.mrb[0].mxu0
    %v579 = vpop.f32.mrb[0].mxu0
    %v580 = vpop.f32.mrb[0].mxu0
    %581 = vdwg.mxu0
    %582 = vst [vmem:[#allocation5] sm:$0x3] %v577
    // Predicated region
    $region18: #{router_forward.1} parent=1 // pred_check
      _
    $region19: #{router_forward.1} parent=1 // pred_check_branch
      %584 = sbr.rel (0) target = $region21
    $region20: #{router_forward.1} parent=1 // pred_region
      %s586 = ssub.s32 32, 32
      %587 = vsyncadd [#allocation4], %s586
      %s589 = sshll.u32 [#allocation5], 4
      %s590 = int_to_ptr.vmem [resolvable:$true] %s589
      %592 = dma.vmem_to_hbm [thread:$0]  %s590, 32, %s3, [#allocation4]
    $region21: #{router_forward.1} parent=1 // pred_fallthru
      _
    // Predicated region
    $region22: #{router_forward.1} parent=1 // pred_check
      _
    $region23: #{router_forward.1} parent=1 // pred_check_branch
      %594 = sbr.rel (0) target = $region25
    $region24: #{router_forward.1} parent=1 // pred_region
      %595 = dma.done [#allocation4], 32
    $region25: #{router_forward.1} parent=1 // pred_fallthru
      _
    %596 = vsyncpa [#allocation3], 1
    %597 = vsyncpa [#allocation4], 1

</llo_original>
